<compile_context>
chip_gen: v7x
topology: tpu7x:2x2x1
jax: 0.10.0
libtpu: 0.0.40
codegen_flags: <defaults>
</compile_context>

<pallas_src>
import math
from functools import partial

import jax
import jax.numpy as jnp
from jax.experimental import pallas as pl
from jax.experimental.pallas import tpu as pltpu


def _rectified_sigmoid_kernel(x_ref, o_ref, *, a, b):
    # sigmoid(x)*(zeta-gamma)+gamma == a*tanh(x/2)+b : single EUP push + VPU fma.
    x = x_ref[...].astype(jnp.float32)
    y = a * jnp.tanh(0.5 * x) + b
    o_ref[...] = jnp.clip(y, 0.0, 1.0).astype(o_ref.dtype)


def _plain_jax(x, a, b):
    y = a * jnp.tanh(0.5 * x.astype(jnp.float32)) + b
    return jnp.clip(y, 0.0, 1.0).astype(x.dtype)


def rectified_sigmoid(x, gamma, zeta):
    """Elementwise clamp(sigmoid(x)*(zeta-gamma)+gamma, 0, 1) via Pallas."""
    orig_shape = x.shape
    dtype = x.dtype
    total = math.prod(orig_shape) if orig_shape else 1

    a = float(0.5 * (float(zeta) - float(gamma)))
    b = float(a + float(gamma))

    # --- tiny-input fast path: less than one vreg of work -------------------
    if total < 8 * 128:
        return _plain_jax(x, a, b)

    # --- choose a lane-dense 2-D view, avoiding any pad when possible -------
    pad = 0
    if len(orig_shape) >= 2 and orig_shape[-1] % 128 == 0:
        # Typical hidden dims: collapse leading dims, minor dim kept -> free.
        lanes = orig_shape[-1]
        rows = total // lanes
        x2d = x.reshape(rows, lanes)
    elif total % 128 == 0:
        # Flatten into the widest lane count that divides exactly -> no pad.
        lanes = next(c for c in (512, 256, 128) if total % c == 0)
        rows = total // lanes
        x2d = x.reshape(rows, lanes)
    else:
        # Ragged total: pad only to the next multiple of 128 (< 128 elements).
        lanes = 128
        rows = pl.cdiv(total, lanes)
        pad = rows * lanes - total
        x2d = jnp.pad(x.reshape(-1), (0, pad)).reshape(rows, lanes)

    # --- tile sizing (~2 MiB tiles; >= 2 grid blocks for v7x megacore) ------
    dtype_bytes = jnp.dtype(dtype).itemsize
    target_elems = (2 * 1024 * 1024) // dtype_bytes

    lane_block = lanes if lanes <= 2048 else 2048        # multiple of 128
    lane_grid = pl.cdiv(lanes, lane_block)

    rb = max(8, min(4096, (target_elems // lane_block) // 8 * 8))
    if rows < 8:
        rb = rows                                        # block == full dim
    else:
        max_rb = rows if rows % 8 == 0 else (rows // 8) * 8
        rb = min(rb, max_rb)
        # Guarantee >= 2 grid blocks so both v7x TensorCores get work.
        while rb > 8 and lane_grid * pl.cdiv(rows, rb) < 2:
            rb = max(8, (rb // 2) // 8 * 8)
    row_grid = pl.cdiv(rows, rb)

    kernel = partial(_rectified_sigmoid_kernel, a=a, b=b)

    out2d = pl.pallas_call(
        kernel,
        out_shape=jax.ShapeDtypeStruct((rows, lanes), dtype),
        grid_spec=pltpu.PrefetchScalarGridSpec(
            num_scalar_prefetch=0,
            grid=(row_grid, lane_grid),
            in_specs=[pl.BlockSpec((rb, lane_block), lambda i, j: (i, j))],
            out_specs=pl.BlockSpec((rb, lane_block), lambda i, j: (i, j)),
        ),
        compiler_params=pltpu.CompilerParams(
            dimension_semantics=("parallel", "parallel"),
            vmem_limit_bytes=32 * 1024 * 1024,
        ),
    )(x2d)

    if pad:
        return out2d.reshape(-1)[:total].reshape(orig_shape)
    return out2d.reshape(orig_shape)


def _reference(x, gamma, zeta):
    s = jax.nn.sigmoid(x.astype(jnp.float32))
    return jnp.clip(s * (zeta - gamma) + gamma, 0.0, 1.0).astype(x.dtype)


if __name__ == "__main__":
    # Typical AdaRound-style constants.
    gamma, zeta = -0.1, 1.1

    key = jax.random.PRNGKey(0)
    k1, k2, k3 = jax.random.split(key, 3)

    # Main demo: small 4-D activation tensor (batch=2, channels=4, 16x16).
    x = jax.random.normal(k1, (2, 4, 16, 16), dtype=jnp.float32) * 3.0
    y = jax.block_until_ready(rectified_sigmoid(x, gamma, zeta))
    assert y.shape == x.shape and y.dtype == x.dtype
    assert jnp.allclose(y, _reference(x, gamma, zeta), atol=1e-5, rtol=1e-5)
    assert float(jnp.min(y)) >= 0.0 and float(jnp.max(y)) <= 1.0

    # No-pad 2-D path: last dim already a multiple of 128 (typical hidden dim).
    x2 = jax.random.normal(k2, (2, 8, 128), dtype=jnp.float32) * 3.0
    y2 = jax.block_until_ready(rectified_sigmoid(x2, gamma, zeta))
    assert jnp.allclose(y2, _reference(x2, gamma, zeta), atol=1e-5, rtol=1e-5)

    # Ragged path: total not a multiple of 128 -> only a tiny (<128 elem) pad.
    x3 = jax.random.normal(k3, (33, 40), dtype=jnp.float32) * 3.0
    y3 = jax.block_until_ready(rectified_sigmoid(x3, gamma, zeta))
    assert y3.shape == x3.shape
    assert jnp.allclose(y3, _reference(x3, gamma, zeta), atol=1e-5, rtol=1e-5)

    print("KERNEL_OK")
</pallas_src>

<mosaic_0001>
module attributes {stable_mosaic.version = 11 : i64} {
  func.func @_rectified_sigmoid_kernel(%arg0: i32, %arg1: i32, %arg2: memref<4x512xf32, #tpu.memory_space<vmem>>, %arg3: memref<4x512xf32, #tpu.memory_space<vmem>>) attributes {dimension_semantics = [#tpu.dimension_semantics<parallel>, #tpu.dimension_semantics<parallel>], iteration_bounds = array<i64: 1, 1>, scalar_prefetch = 0 : i64, scratch_operands = 0 : i64, tpu.core_type = #tpu.core_type<tc>, window_params = [{transform_indices = @transform_0, window_bounds = array<i64: 4, 512>}, {transform_indices = @transform_1, window_bounds = array<i64: 4, 512>}]} {
    %c0 = arith.constant 0 : index
    %c0_0 = arith.constant 0 : index
    %0 = vector.load %arg2[%c0, %c0_0] : memref<4x512xf32, #tpu.memory_space<vmem>>, vector<4x512xf32>
    %cst = arith.constant 5.000000e-01 : f32
    %1 = vector.broadcast %cst : f32 to vector<4x512xf32>
    %2 = arith.mulf %1, %0 : vector<4x512xf32>
    %3 = math.tanh %2 : vector<4x512xf32>
    %cst_1 = arith.constant 6.000000e-01 : f32
    %4 = vector.broadcast %cst_1 : f32 to vector<4x512xf32>
    %5 = arith.mulf %4, %3 : vector<4x512xf32>
    %cst_2 = arith.constant 5.000000e-01 : f32
    %6 = vector.broadcast %cst_2 : f32 to vector<4x512xf32>
    %7 = arith.addf %5, %6 : vector<4x512xf32>
    %cst_3 = arith.constant 0.000000e+00 : f32
    %cst_4 = arith.constant 1.000000e+00 : f32
    %8 = vector.broadcast %cst_3 : f32 to vector<4x512xf32>
    %9 = arith.maximumf %8, %7 : vector<4x512xf32>
    %10 = vector.broadcast %cst_4 : f32 to vector<4x512xf32>
    %11 = arith.minimumf %10, %9 : vector<4x512xf32>
    %c0_5 = arith.constant 0 : index
    %c0_6 = arith.constant 0 : index
    %12 = vector.load %arg3[%c0_5, %c0_6] : memref<4x512xf32, #tpu.memory_space<vmem>>, vector<4x512xf32>
    tpu.vector_store %arg3[%c0_5, %c0_6], %11 {strides = array<i32>} : memref<4x512xf32, #tpu.memory_space<vmem>>, vector<4x512xf32>,
    return
  }
  func.func @transform_0(%arg0: i32, %arg1: i32) -> (i32, i32) {
    %c0_i32 = arith.constant 0 : i32
    return %arg0, %arg1 : i32, i32
  }
  func.func @transform_1(%arg0: i32, %arg1: i32) -> (i32, i32) {
    %c0_i32 = arith.constant 0 : i32
    return %arg0, %arg1 : i32, i32
  }
}

</mosaic_0001>

<llo_original>
// kernel: tpu_custom_call.1
$region0: #{tpu_custom_call.1}
  #allocation0 [shape = 'u32[]', space=smem, size = 0x4, offset = 0x4, fixed_abs, tag = 'smem constant byte address 0x4 - core index']
  #allocation1 [shape = 'u32[144,128]{1,0:T(1,128)}', space=vmem, size = 0x12000, scoped, tag = 'internal scratch']
  %s0 = inlined_call_operand.hbm [shape: f32[4,512], index: 0, kind: input, shape index: {}]
  %s1 = inlined_call_operand.hbm [shape: f32[4,512], index: 1, kind: output, shape index: {}]
  %s2 = sld [smem:[#allocation0]]
  $region18: #{tpu_custom_call.1} parent=0
    _
  %s4 = ssub.s32 1, %s2
  %s5 = scalar_select 0, %s4, %s2
  $region1: #{tpu_custom_call.1} parent=0
    #allocation2 [shape = 'u8[8192]{0}', space=vmem, size = 0x2000, scoped, tag = 'input window, operand 0, single buffered']
    #allocation3 [shape = 's32[1]{0}', space=sflag, size = 0x4, scoped, tag = 'scoped memory for tpu_custom_call.1']
    #allocation4 [shape = 's32[1]{0}', space=sflag, size = 0x4, scoped, tag = 'scoped memory for tpu_custom_call.1']
    #allocation5 [shape = 'u8[8192]{0}', space=vmem, size = 0x2000, scoped, tag = 'output window, operand 0, single buffered']
    %6 = vsyncpa [#allocation3], 0
    %7 = vsyncpa [#allocation4], 0
    // Predicated region
    $region2: #{tpu_custom_call.1} parent=1 // pred_check
      _
    $region3: #{tpu_custom_call.1} parent=1 // pred_check_branch
      %9 = sbr.rel (0) target = $region5
    $region4: #{tpu_custom_call.1} parent=1 // pred_region
      %s11 = ssub.s32 256, 256
      %12 = vsyncadd [#allocation3], %s11
      %s14 = sshll.u32 [#allocation2], 4
      %s15 = int_to_ptr.vmem [resolvable:$true] %s14
      %17 = dma.hbm_to_vmem [thread:$0]  %s0, 256, %s15, [#allocation3]
    $region5: #{tpu_custom_call.1} parent=1 // pred_fallthru
      _
    // Predicated region
    $region6: #{tpu_custom_call.1} parent=1 // pred_check
      _
    $region7: #{tpu_custom_call.1} parent=1 // pred_check_branch
      %19 = sbr.rel (0) target = $region9
    $region8: #{tpu_custom_call.1} parent=1 // pred_region
      %20 = dma.done [#allocation3], 256
    $region9: #{tpu_custom_call.1} parent=1 // pred_fallthru
      _
    %v21 = vld [vmem:[#allocation2] sm:$0xff]
    %v22 = vld [vmem:[#allocation2 + $0x8] sm:$0xff]
    %v23 = vmul.f32 %v21, 0.5
    %v24 = vmul.f32 %v22, 0.5
    %v25 = vtanh.pop %v23
    %v26 = vtanh.pop %v24
    %v27 = vmul.f32 %v25, 0.6
    %v28 = vmul.f32 %v26, 0.6
    %v29 = vadd.f32 %v27, 0.5
    %v30 = vadd.f32 %v28, 0.5
    %v31 = vmax.f32 %v29, 0.0
    %v32 = vmax.f32 %v30, 0.0
    %v33 = vmin.f32 %v31, 1.0
    %v34 = vmin.f32 %v32, 1.0
    %35 = vst [vmem:[#allocation5] sm:$0xff] %v33
    %36 = vst [vmem:[#allocation5 + $0x8] sm:$0xff] %v34
    // Predicated region
    $region10: #{tpu_custom_call.1} parent=1 // pred_check
      _
    $region11: #{tpu_custom_call.1} parent=1 // pred_check_branch
      %38 = sbr.rel (0) target = $region13
    $region12: #{tpu_custom_call.1} parent=1 // pred_region
      %s40 = ssub.s32 256, 256
      %41 = vsyncadd [#allocation4], %s40
      %s43 = sshll.u32 [#allocation5], 4
      %s44 = int_to_ptr.vmem [resolvable:$true] %s43
      %46 = dma.vmem_to_hbm [thread:$0]  %s44, 256, %s1, [#allocation4]
    $region13: #{tpu_custom_call.1} parent=1 // pred_fallthru
      _
    // Predicated region
    $region14: #{tpu_custom_call.1} parent=1 // pred_check
      _
    $region15: #{tpu_custom_call.1} parent=1 // pred_check_branch
      %48 = sbr.rel (0) target = $region17
    $region16: #{tpu_custom_call.1} parent=1 // pred_region
      %49 = dma.done [#allocation4], 256
    $region17: #{tpu_custom_call.1} parent=1 // pred_fallthru
      _
    %50 = vsyncpa [#allocation3], 1
    %51 = vsyncpa [#allocation4], 1

</llo_original>
